<compile_context>
chip_gen: v6e
topology: v6e:2x2x1
jax: 0.10.0
libtpu: 0.0.40
codegen_flags: <defaults>
</compile_context>

<pallas_src>
import functools

import jax
import jax.numpy as jnp
from jax import lax
from jax.experimental import pallas as pl
from jax.experimental.pallas import tpu as pltpu

EPS = 1e-5

# contract lhs dim 1 with rhs dim 1  (A @ B^T) — same pattern as q @ k^T.
_TRANS_B = (((1,), (1,)), ((), ()))


def _bn_relu(h, gamma, beta, inv_n):
    """Batch-stat BatchNorm1d + ReLU: single-pass moments + one affine pass."""
    mu = jnp.sum(h, axis=1, keepdims=True) * inv_n
    ex2 = jnp.sum(h * h, axis=1, keepdims=True) * inv_n
    var = ex2 - mu * mu                       # biased var (PyTorch BN train mode)
    scale = gamma * lax.rsqrt(var + EPS)      # (C, 1)
    shift = beta - mu * scale                 # (C, 1)
    return jnp.maximum(h * scale + shift, 0.0)


def _kpenc_kernel(kpts_ref, scores_ref, w1_ref, w2_ref, w3_ref, p_ref, out_ref,
                  *, c1, c2, fd, offs, inv_n):
    """Fused Conv1d(k=1) -> BN -> ReLU -> Conv1d -> BN -> ReLU -> Conv1d."""
    kpts = kpts_ref[...].astype(jnp.float32)      # (N, 4)
    sc = scores_ref[...].astype(jnp.float32)      # (1, N)
    w1 = w1_ref[...].astype(jnp.float32)          # (c1, 5)

    # ---- layer 1: conv1x1 over [kpts^T ; scores] without materializing (5,N).
    # Conv bias b1 omitted: cancelled exactly by BN mean subtraction.
    h = lax.dot_general(w1[:, :4], kpts, _TRANS_B,
                        preferred_element_type=jnp.float32)       # (c1, N)
    h = h + w1[:, 4:5] * sc                                       # score channel
    h = _bn_relu(h,
                 p_ref[offs[0]:offs[0] + c1, :],
                 p_ref[offs[1]:offs[1] + c1, :], inv_n)

    # ---- layer 2 (bias b2 also cancelled by BN) ----
    h = jnp.dot(w2_ref[...], h, preferred_element_type=jnp.float32)
    h = _bn_relu(h,
                 p_ref[offs[2]:offs[2] + c2, :],
                 p_ref[offs[3]:offs[3] + c2, :], inv_n)

    # ---- layer 3: conv1x1 + bias, no BN / ReLU ----
    b3 = p_ref[offs[4]:offs[4] + fd, :]
    out_ref[...] = (jnp.dot(w3_ref[...], h, preferred_element_type=jnp.float32)
                    + b3).astype(out_ref.dtype)


def _pad8_rows(v):
    pad = (-v.shape[0]) % 8
    return jnp.pad(v, ((0, pad), (0, 0))) if pad else v


def _pack_channel_params(vecs):
    """Pack (C,1) per-channel vectors along sublanes with 8-aligned offsets."""
    offs, pieces, row = [], [], 0
    for v in vecs:
        offs.append(row)
        p = _pad8_rows(v.astype(jnp.float32))
        pieces.append(p)
        row += p.shape[0]
    return jnp.concatenate(pieces, axis=0), tuple(offs)


def keypoint_encoder_pallas(kpts, scores, params):
    """kpts: (1, N, 4) f32, scores: (N,) f32.  Returns (1, feature_dim, N)."""
    assert kpts.shape[0] == 1, "forward implies batch size 1 (scores gets [None,None])"
    n = kpts.shape[1]

    # b1 / b2 are numerically dead under batch-stat BN; not passed to the kernel.
    (w1, _b1, g1, be1, w2, _b2, g2, be2, w3, b3) = params
    c1, c2, fd = w1.shape[0], w2.shape[0], w3.shape[0]

    packed, offs = _pack_channel_params((g1, be1, g2, be2, b3))
    scores2d = scores.reshape(1, n).astype(jnp.float32)

    kernel = functools.partial(_kpenc_kernel, c1=c1, c2=c2, fd=fd,
                               offs=offs, inv_n=1.0 / n)

    operands = (kpts, scores2d, w1, w2, w3, packed)
    in_specs = [
        pl.BlockSpec((None, n, 4), lambda i: (0, 0, 0)),   # kpts, batch dim squeezed
        pl.BlockSpec((1, n), lambda i: (0, 0)),            # scores
        pl.BlockSpec(w1.shape, lambda i: (0, 0)),
        pl.BlockSpec(w2.shape, lambda i: (0, 0)),
        pl.BlockSpec(w3.shape, lambda i: (0, 0)),
        pl.BlockSpec(packed.shape, lambda i: (0, 0)),      # packed per-channel params
    ]

    out = pl.pallas_call(
        kernel,
        out_shape=jax.ShapeDtypeStruct((fd, n), jnp.float32),
        grid=(1,),
        in_specs=in_specs,
        out_specs=pl.BlockSpec((fd, n), lambda i: (0, 0)),
        compiler_params=pltpu.CompilerParams(
            dimension_semantics=("arbitrary",)),
    )(*operands)
    return out[None]                                       # (1, feature_dim, N)


def keypoint_encoder_ref(kpts, scores, params):
    """Pure-JAX reference of the PyTorch forward (for correctness check)."""
    x = jnp.concatenate([jnp.transpose(kpts[0], (1, 0)), scores[None, :]], 0)
    (w1, b1, g1, be1, w2, b2, g2, be2, w3, b3) = params

    def conv_bn_relu(h, w, b, g, be):
        h = w @ h + b
        mu = jnp.mean(h, axis=1, keepdims=True)
        var = jnp.mean((h - mu) ** 2, axis=1, keepdims=True)
        h = (h - mu) / jnp.sqrt(var + EPS) * g + be
        return jnp.maximum(h, 0.0)

    h = conv_bn_relu(x, w1, b1, g1, be1)
    h = conv_bn_relu(h, w2, b2, g2, be2)
    return (w3 @ h + b3)[None]


def init_params(key, layers, feature_dim):
    """Deterministic synthetic params matching Conv1d/BN1d shapes."""
    channels = [5] + list(layers) + [feature_dim]
    keys = jax.random.split(key, 2 * (len(channels) - 1))
    params = []
    for i in range(1, len(channels)):
        cin, cout = channels[i - 1], channels[i]
        bound = 1.0 / jnp.sqrt(cin)
        w = jax.random.uniform(keys[2 * (i - 1)], (cout, cin), jnp.float32,
                               -bound, bound)
        if i == len(channels) - 1:
            b = jnp.zeros((cout, 1), jnp.float32)             # last bias = 0
        else:
            b = jax.random.uniform(keys[2 * (i - 1) + 1], (cout, 1), jnp.float32,
                                   -bound, bound)
        params.append(w)
        params.append(b)
        if i < len(channels) - 1:
            params.append(jnp.ones((cout, 1), jnp.float32))   # BN gamma
            params.append(jnp.zeros((cout, 1), jnp.float32))  # BN beta
    return tuple(params)


if __name__ == "__main__":
    feature_dim = 32
    mlp_layers = [32, 64]
    N = 256                                                   # number of keypoints

    key = jax.random.PRNGKey(0)
    k_kpts, k_scores, k_params = jax.random.split(key, 3)

    kpts = jax.random.normal(k_kpts, (1, N, 4), jnp.float32)
    scores = jax.random.uniform(k_scores, (N,), jnp.float32)
    params = init_params(k_params, mlp_layers, feature_dim)

    out = keypoint_encoder_pallas(kpts, scores, params)
    out = jax.block_until_ready(out)

    ref = keypoint_encoder_ref(kpts, scores, params)
    assert out.shape == (1, feature_dim, N)
    assert jnp.allclose(out, ref, atol=1e-4, rtol=1e-4), "mismatch vs reference"

    print("KERNEL_OK")
</pallas_src>

<mosaic_0001>
module attributes {stable_mosaic.version = 11 : i64} {
  func.func @_kpenc_kernel(%arg0: i32, %arg1: memref<1x256x4xf32, #tpu.memory_space<vmem>>, %arg2: memref<1x256xf32, #tpu.memory_space<vmem>>, %arg3: memref<32x5xf32, #tpu.memory_space<vmem>>, %arg4: memref<64x32xf32, #tpu.memory_space<vmem>>, %arg5: memref<32x64xf32, #tpu.memory_space<vmem>>, %arg6: memref<224x1xf32, #tpu.memory_space<vmem>>, %arg7: memref<32x256xf32, #tpu.memory_space<vmem>>) attributes {dimension_semantics = [#tpu.dimension_semantics<arbitrary>], iteration_bounds = array<i64: 1>, scalar_prefetch = 0 : i64, scratch_operands = 0 : i64, tpu.core_type = #tpu.core_type<tc>, window_params = [{pipeline_mode = #tpu.pipeline_mode<synchronous>, transform_indices = @transform_0, window_bounds = array<i64: 1, 256, 4>}, {pipeline_mode = #tpu.pipeline_mode<synchronous>, transform_indices = @transform_1, window_bounds = array<i64: 1, 256>}, {pipeline_mode = #tpu.pipeline_mode<synchronous>, transform_indices = @transform_2, window_bounds = array<i64: 32, 5>}, {pipeline_mode = #tpu.pipeline_mode<synchronous>, transform_indices = @transform_3, window_bounds = array<i64: 64, 32>}, {pipeline_mode = #tpu.pipeline_mode<synchronous>, transform_indices = @transform_4, window_bounds = array<i64: 32, 64>}, {pipeline_mode = #tpu.pipeline_mode<synchronous>, transform_indices = @transform_5, window_bounds = array<i64: 224, 1>}, {pipeline_mode = #tpu.pipeline_mode<synchronous>, transform_indices = @transform_6, window_bounds = array<i64: 32, 256>}]} {
    %c0 = arith.constant 0 : index
    %c0_0 = arith.constant 0 : index
    %c0_1 = arith.constant 0 : index
    %0 = vector.load %arg1[%c0, %c0_0, %c0_1] : memref<1x256x4xf32, #tpu.memory_space<vmem>>, vector<1x256x4xf32>
    %1 = vector.shape_cast %0 : vector<1x256x4xf32> to vector<256x4xf32>
    %c0_2 = arith.constant 0 : index
    %c0_3 = arith.constant 0 : index
    %2 = vector.load %arg2[%c0_2, %c0_3] : memref<1x256xf32, #tpu.memory_space<vmem>>, vector<1x256xf32>
    %c0_4 = arith.constant 0 : index
    %c0_5 = arith.constant 0 : index
    %3 = vector.load %arg3[%c0_4, %c0_5] : memref<32x5xf32, #tpu.memory_space<vmem>>, vector<32x5xf32>
    %4 = vector.extract_strided_slice %3 {offsets = [0, 0], sizes = [32, 4], strides = [1, 1]} : vector<32x5xf32> to vector<32x4xf32>
    %cst = arith.constant dense<0.000000e+00> : vector<32x256xf32>
    %5 = tpu.matmul %4, %1, %cst {dimension_numbers = #tpu.dot_dimension_numbers<[1], [1], [0], [0], [0, 0, 1, 0], [], []>} : vector<32x4xf32>, vector<256x4xf32>, vector<32x256xf32> -> vector<32x256xf32>
    %6 = vector.extract_strided_slice %3 {offsets = [0, 4], sizes = [32, 1], strides = [1, 1]} : vector<32x5xf32> to vector<32x1xf32>
    %7 = vector.broadcast %6 : vector<32x1xf32> to vector<32x256xf32>
    %8 = vector.broadcast %2 : vector<1x256xf32> to vector<32x256xf32>
    %9 = arith.mulf %7, %8 : vector<32x256xf32>
    %10 = arith.addf %5, %9 : vector<32x256xf32>
    %c0_6 = arith.constant 0 : index
    %c0_7 = arith.constant 0 : index
    %11 = vector.load %arg6[%c0_6, %c0_7] : memref<224x1xf32, #tpu.memory_space<vmem>>, vector<32x1xf32>
    %c32 = arith.constant 32 : index
    %c0_8 = arith.constant 0 : index
    %12 = vector.load %arg6[%c32, %c0_8] : memref<224x1xf32, #tpu.memory_space<vmem>>, vector<32x1xf32>
    %cst_9 = arith.constant dense<0.000000e+00> : vector<32xf32>
    %13 = vector.multi_reduction <add>, %10, %cst_9 [1] : vector<32x256xf32> to vector<32xf32>
    %14 = vector.shape_cast %13 : vector<32xf32> to vector<32x1xf32>
    %cst_10 = arith.constant 3.906250e-03 : f32
    %15 = vector.broadcast %cst_10 : f32 to vector<32x1xf32>
    %16 = arith.mulf %14, %15 : vector<32x1xf32>
    %17 = arith.mulf %10, %10 : vector<32x256xf32>
    %cst_11 = arith.constant dense<0.000000e+00> : vector<32xf32>
    %18 = vector.multi_reduction <add>, %17, %cst_11 [1] : vector<32x256xf32> to vector<32xf32>
    %19 = vector.shape_cast %18 : vector<32xf32> to vector<32x1xf32>
    %cst_12 = arith.constant 3.906250e-03 : f32
    %20 = vector.broadcast %cst_12 : f32 to vector<32x1xf32>
    %21 = arith.mulf %19, %20 : vector<32x1xf32>
    %22 = arith.mulf %16, %16 : vector<32x1xf32>
    %23 = arith.subf %21, %22 : vector<32x1xf32>
    %cst_13 = arith.constant 9.99999974E-6 : f32
    %24 = vector.broadcast %cst_13 : f32 to vector<32x1xf32>
    %25 = arith.addf %23, %24 : vector<32x1xf32>
    %26 = math.rsqrt %25 : vector<32x1xf32>
    %27 = arith.mulf %11, %26 : vector<32x1xf32>
    %28 = arith.mulf %16, %27 : vector<32x1xf32>
    %29 = arith.subf %12, %28 : vector<32x1xf32>
    %30 = vector.broadcast %27 : vector<32x1xf32> to vector<32x256xf32>
    %31 = arith.mulf %10, %30 : vector<32x256xf32>
    %32 = vector.broadcast %29 : vector<32x1xf32> to vector<32x256xf32>
    %33 = arith.addf %31, %32 : vector<32x256xf32>
    %cst_14 = arith.constant 0.000000e+00 : f32
    %34 = vector.broadcast %cst_14 : f32 to vector<32x256xf32>
    %35 = arith.maximumf %33, %34 : vector<32x256xf32>
    %c0_15 = arith.constant 0 : index
    %c0_16 = arith.constant 0 : index
    %36 = vector.load %arg4[%c0_15, %c0_16] : memref<64x32xf32, #tpu.memory_space<vmem>>, vector<64x32xf32>
    %cst_17 = arith.constant dense<0.000000e+00> : vector<64x256xf32>
    %37 = tpu.matmul %36, %35, %cst_17 {dimension_numbers = #tpu.dot_dimension_numbers<[1], [0], [0], [1], [0, 0, 1, 1], [], []>} : vector<64x32xf32>, vector<32x256xf32>, vector<64x256xf32> -> vector<64x256xf32>
    %c64 = arith.constant 64 : index
    %c0_18 = arith.constant 0 : index
    %38 = vector.load %arg6[%c64, %c0_18] : memref<224x1xf32, #tpu.memory_space<vmem>>, vector<64x1xf32>
    %c128 = arith.constant 128 : index
    %c0_19 = arith.constant 0 : index
    %39 = vector.load %arg6[%c128, %c0_19] : memref<224x1xf32, #tpu.memory_space<vmem>>, vector<64x1xf32>
    %cst_20 = arith.constant dense<0.000000e+00> : vector<64xf32>
    %40 = vector.multi_reduction <add>, %37, %cst_20 [1] : vector<64x256xf32> to vector<64xf32>
    %41 = vector.shape_cast %40 : vector<64xf32> to vector<64x1xf32>
    %cst_21 = arith.constant 3.906250e-03 : f32
    %42 = vector.broadcast %cst_21 : f32 to vector<64x1xf32>
    %43 = arith.mulf %41, %42 : vector<64x1xf32>
    %44 = arith.mulf %37, %37 : vector<64x256xf32>
    %cst_22 = arith.constant dense<0.000000e+00> : vector<64xf32>
    %45 = vector.multi_reduction <add>, %44, %cst_22 [1] : vector<64x256xf32> to vector<64xf32>
    %46 = vector.shape_cast %45 : vector<64xf32> to vector<64x1xf32>
    %cst_23 = arith.constant 3.906250e-03 : f32
    %47 = vector.broadcast %cst_23 : f32 to vector<64x1xf32>
    %48 = arith.mulf %46, %47 : vector<64x1xf32>
    %49 = arith.mulf %43, %43 : vector<64x1xf32>
    %50 = arith.subf %48, %49 : vector<64x1xf32>
    %cst_24 = arith.constant 9.99999974E-6 : f32
    %51 = vector.broadcast %cst_24 : f32 to vector<64x1xf32>
    %52 = arith.addf %50, %51 : vector<64x1xf32>
    %53 = math.rsqrt %52 : vector<64x1xf32>
    %54 = arith.mulf %38, %53 : vector<64x1xf32>
    %55 = arith.mulf %43, %54 : vector<64x1xf32>
    %56 = arith.subf %39, %55 : vector<64x1xf32>
    %57 = vector.broadcast %54 : vector<64x1xf32> to vector<64x256xf32>
    %58 = arith.mulf %37, %57 : vector<64x256xf32>
    %59 = vector.broadcast %56 : vector<64x1xf32> to vector<64x256xf32>
    %60 = arith.addf %58, %59 : vector<64x256xf32>
    %cst_25 = arith.constant 0.000000e+00 : f32
    %61 = vector.broadcast %cst_25 : f32 to vector<64x256xf32>
    %62 = arith.maximumf %60, %61 : vector<64x256xf32>
    %c192 = arith.constant 192 : index
    %c0_26 = arith.constant 0 : index
    %63 = vector.load %arg6[%c192, %c0_26] : memref<224x1xf32, #tpu.memory_space<vmem>>, vector<32x1xf32>
    %c0_27 = arith.constant 0 : index
    %c0_28 = arith.constant 0 : index
    %64 = vector.load %arg5[%c0_27, %c0_28] : memref<32x64xf32, #tpu.memory_space<vmem>>, vector<32x64xf32>
    %cst_29 = arith.constant dense<0.000000e+00> : vector<32x256xf32>
    %65 = tpu.matmul %64, %62, %cst_29 {dimension_numbers = #tpu.dot_dimension_numbers<[1], [0], [0], [1], [0, 0, 1, 1], [], []>} : vector<32x64xf32>, vector<64x256xf32>, vector<32x256xf32> -> vector<32x256xf32>
    %66 = vector.broadcast %63 : vector<32x1xf32> to vector<32x256xf32>
    %67 = arith.addf %65, %66 : vector<32x256xf32>
    %c0_30 = arith.constant 0 : index
    %c0_31 = arith.constant 0 : index
    %68 = vector.load %arg7[%c0_30, %c0_31] : memref<32x256xf32, #tpu.memory_space<vmem>>, vector<32x256xf32>
    tpu.vector_store %arg7[%c0_30, %c0_31], %67 {strides = array<i32>} : memref<32x256xf32, #tpu.memory_space<vmem>>, vector<32x256xf32>,
    return
  }
  func.func @transform_0(%arg0: i32) -> (i32, i32, i32) {
    %c0_i32 = arith.constant 0 : i32
    %c0_i32_0 = arith.constant 0 : i32
    %c0_i32_1 = arith.constant 0 : i32
    %c0_i32_2 = arith.constant 0 : i32
    return %c0_i32, %c0_i32_0, %c0_i32_1 : i32, i32, i32
  }
  func.func @transform_1(%arg0: i32) -> (i32, i32) {
    %c0_i32 = arith.constant 0 : i32
    %c0_i32_0 = arith.constant 0 : i32
    %c0_i32_1 = arith.constant 0 : i32
    return %c0_i32, %c0_i32_0 : i32, i32
  }
  func.func @transform_2(%arg0: i32) -> (i32, i32) {
    %c0_i32 = arith.constant 0 : i32
    %c0_i32_0 = arith.constant 0 : i32
    %c0_i32_1 = arith.constant 0 : i32
    return %c0_i32, %c0_i32_0 : i32, i32
  }
  func.func @transform_3(%arg0: i32) -> (i32, i32) {
    %c0_i32 = arith.constant 0 : i32
    %c0_i32_0 = arith.constant 0 : i32
    %c0_i32_1 = arith.constant 0 : i32
    return %c0_i32, %c0_i32_0 : i32, i32
  }
  func.func @transform_4(%arg0: i32) -> (i32, i32) {
    %c0_i32 = arith.constant 0 : i32
    %c0_i32_0 = arith.constant 0 : i32
    %c0_i32_1 = arith.constant 0 : i32
    return %c0_i32, %c0_i32_0 : i32, i32
  }
  func.func @transform_5(%arg0: i32) -> (i32, i32) {
    %c0_i32 = arith.constant 0 : i32
    %c0_i32_0 = arith.constant 0 : i32
    %c0_i32_1 = arith.constant 0 : i32
    return %c0_i32, %c0_i32_0 : i32, i32
  }
  func.func @transform_6(%arg0: i32) -> (i32, i32) {
    %c0_i32 = arith.constant 0 : i32
    %c0_i32_0 = arith.constant 0 : i32
    %c0_i32_1 = arith.constant 0 : i32
    return %c0_i32, %c0_i32_0 : i32, i32
  }
}

</mosaic_0001>

<llo_original>
// kernel: tpu_custom_call.1
$region0: #{tpu_custom_call.1}
  #allocation0 [shape = 'u32[]', space=smem, size = 0x4, offset = 0x4, fixed_abs, tag = 'smem constant byte address 0x4 - core index']
  #allocation1 [shape = 'u32[144,128]{1,0:T(1,128)}', space=vmem, size = 0x12000, scoped, tag = 'internal scratch']
  %s0 = inlined_call_operand.vmem [shape: f32[1,256,4], index: 0, kind: input, shape index: {}]
  %s1 = inlined_call_operand.vmem [shape: f32[1,256], index: 1, kind: input, shape index: {}]
  %s2 = inlined_call_operand.vmem [shape: f32[32,5], index: 2, kind: input, shape index: {}]
  %s3 = inlined_call_operand.vmem [shape: f32[64,32], index: 3, kind: input, shape index: {}]
  %s4 = inlined_call_operand.vmem [shape: f32[32,64], index: 4, kind: input, shape index: {}]
  %s5 = inlined_call_operand.vmem [shape: f32[224,1], index: 5, kind: input, shape index: {}]
  %s6 = inlined_call_operand.hbm [shape: f32[32,256], index: 6, kind: output, shape index: {}]
  %s7 = sld [smem:[#allocation0]]
  $region34: #{tpu_custom_call.1} parent=0
    _
  %s9 = ssub.s32 1, %s7
  %s10 = scalar_select 0, %s9, %s7
  $region1: #{tpu_custom_call.1} parent=0
    #allocation2 [shape = 'u8[32768]{0}', space=vmem, size = 0x8000, scoped, tag = 'output window, operand 0, single buffered']
    #allocation3 [shape = 's32[1]{0}', space=sflag, size = 0x4, scoped, tag = 'scoped memory for tpu_custom_call.1']
    %11 = vsyncpa [#allocation3], 0
    // Predicated region
    $region2: #{tpu_custom_call.1} parent=1 // pred_check
      _
    $region3: #{tpu_custom_call.1} parent=1 // pred_check_branch
      %13 = sbr.rel (0) target = $region5
    $region4: #{tpu_custom_call.1} parent=1 // pred_region
      _
    $region5: #{tpu_custom_call.1} parent=1 // pred_fallthru
      _
    // Predicated region
    $region6: #{tpu_custom_call.1} parent=1 // pred_check
      _
    $region7: #{tpu_custom_call.1} parent=1 // pred_check_branch
      %15 = sbr.rel (0) target = $region9
    $region8: #{tpu_custom_call.1} parent=1 // pred_region
      _
    $region9: #{tpu_custom_call.1} parent=1 // pred_fallthru
      _
    // Predicated region
    $region10: #{tpu_custom_call.1} parent=1 // pred_check
      _
    $region11: #{tpu_custom_call.1} parent=1 // pred_check_branch
      %17 = sbr.rel (0) target = $region13
    $region12: #{tpu_custom_call.1} parent=1 // pred_region
      _
    $region13: #{tpu_custom_call.1} parent=1 // pred_fallthru
      _
    // Predicated region
    $region14: #{tpu_custom_call.1} parent=1 // pred_check
      _
    $region15: #{tpu_custom_call.1} parent=1 // pred_check_branch
      %19 = sbr.rel (0) target = $region17
    $region16: #{tpu_custom_call.1} parent=1 // pred_region
      _
    $region17: #{tpu_custom_call.1} parent=1 // pred_fallthru
      _
    // Predicated region
    $region18: #{tpu_custom_call.1} parent=1 // pred_check
      _
    $region19: #{tpu_custom_call.1} parent=1 // pred_check_branch
      %21 = sbr.rel (0) target = $region21
    $region20: #{tpu_custom_call.1} parent=1 // pred_region
      _
    $region21: #{tpu_custom_call.1} parent=1 // pred_fallthru
      _
    // Predicated region
    $region22: #{tpu_custom_call.1} parent=1 // pred_check
      _
    $region23: #{tpu_custom_call.1} parent=1 // pred_check_branch
      %23 = sbr.rel (0) target = $region25
    $region24: #{tpu_custom_call.1} parent=1 // pred_region
      _
    $region25: #{tpu_custom_call.1} parent=1 // pred_fallthru
      _
    %v24 = vld [vmem:[%s0] sm:$0xff]
    %v25 = vld [vmem:[%s0 + $0x8] sm:$0xff]
    %v26 = vld [vmem:[%s0 + $0x10] sm:$0xff]
    %v27 = vld [vmem:[%s0 + $0x18] sm:$0xff]
    %v28 = vld [vmem:[%s0 + $0x20] sm:$0xff]
    %v29 = vld [vmem:[%s0 + $0x28] sm:$0xff]
    %v30 = vld [vmem:[%s0 + $0x30] sm:$0xff]
    %v31 = vld [vmem:[%s0 + $0x38] sm:$0xff]
    %v32 = vld [vmem:[%s0 + $0x40] sm:$0xff]
    %v33 = vld [vmem:[%s0 + $0x48] sm:$0xff]
    %v34 = vld [vmem:[%s0 + $0x50] sm:$0xff]
    %v35 = vld [vmem:[%s0 + $0x58] sm:$0xff]
    %v36 = vld [vmem:[%s0 + $0x60] sm:$0xff]
    %v37 = vld [vmem:[%s0 + $0x68] sm:$0xff]
    %v38 = vld [vmem:[%s0 + $0x70] sm:$0xff]
    %v39 = vld [vmem:[%s0 + $0x78] sm:$0xff]
    %v40 = vld [vmem:[%s0 + $0x80] sm:$0xff]
    %v41 = vld [vmem:[%s0 + $0x88] sm:$0xff]
    %v42 = vld [vmem:[%s0 + $0x90] sm:$0xff]
    %v43 = vld [vmem:[%s0 + $0x98] sm:$0xff]
    %v44 = vld [vmem:[%s0 + $0xa0] sm:$0xff]
    %v45 = vld [vmem:[%s0 + $0xa8] sm:$0xff]
    %v46 = vld [vmem:[%s0 + $0xb0] sm:$0xff]
    %v47 = vld [vmem:[%s0 + $0xb8] sm:$0xff]
    %v48 = vld [vmem:[%s0 + $0xc0] sm:$0xff]
    %v49 = vld [vmem:[%s0 + $0xc8] sm:$0xff]
    %v50 = vld [vmem:[%s0 + $0xd0] sm:$0xff]
    %v51 = vld [vmem:[%s0 + $0xd8] sm:$0xff]
    %v52 = vld [vmem:[%s0 + $0xe0] sm:$0xff]
    %v53 = vld [vmem:[%s0 + $0xe8] sm:$0xff]
    %v54 = vld [vmem:[%s0 + $0xf0] sm:$0xff]
    %v55 = vld [vmem:[%s0 + $0xf8] sm:$0xff]
    %v56 = vld [vmem:[%s1] sm:$0x3]
    %v57 = vld [vmem:[%s2] sm:$0xff]
    %v58 = vld [vmem:[%s2 + $0x8] sm:$0xff]
    %v59 = vld [vmem:[%s2 + $0x10] sm:$0xff]
    %v60 = vld [vmem:[%s2 + $0x18] sm:$0xff]
    %62 = vset.pattern.permute.xlu0 4
    %63 = vperm.xlu0 %62, %v57
    %v64 = vpop.permute.xlu0 %63
    %67 = vset.pattern.permute.xlu0 4
    %68 = vperm.xlu0 %67, %v58
    %v69 = vpop.permute.xlu0 %68
    %72 = vset.pattern.permute.xlu0 4
    %73 = vperm.xlu0 %72, %v59
    %v74 = vpop.permute.xlu0 %73
    %77 = vset.pattern.permute.xlu0 4
    %78 = vperm.xlu0 %77, %v60
    %v79 = vpop.permute.xlu0 %78
    %v82 = vlaneseq
    %v83 = vshrl.u32 %v82, 7
    %v84 = vsub.s32 0, %v83
    %v85 = vrot.slane %v56, %v84
    %v86 = vlaneseq
    %v87 = vshrl.u32 %v86, 7
    %v88 = vsub.s32 1, %v87
    %v89 = vrot.slane %v56, %v88
    %v92 = vmul.f32 %v64, %v85
    %v93 = vmul.f32 %v64, %v89
    %v94 = vmul.f32 %v69, %v85
    %v95 = vmul.f32 %v69, %v89
    %v96 = vmul.f32 %v74, %v85
    %v97 = vmul.f32 %v74, %v89
    %v98 = vmul.f32 %v79, %v85
    %v99 = vmul.f32 %v79, %v89
    %vm100 = vcmask 31744
    %v101 = vsel %vm100, %v57, 0
    %v103 = vsel %vm100, %v58, 0
    %v105 = vsel %vm100, %v59, 0
    %v107 = vsel %vm100, %v60, 0
    %v110 = vsel %vm100, %v24, 0
    %v113 = vsel %vm100, %v25, 0
    %v116 = vsel %vm100, %v26, 0
    %v119 = vsel %vm100, %v27, 0
    %v122 = vsel %vm100, %v28, 0
    %v125 = vsel %vm100, %v29, 0
    %v128 = vsel %vm100, %v30, 0
    %v131 = vsel %vm100, %v31, 0
    %v134 = vsel %vm100, %v32, 0
    %v137 = vsel %vm100, %v33, 0
    %v140 = vsel %vm100, %v34, 0
    %v143 = vsel %vm100, %v35, 0
    %v146 = vsel %vm100, %v36, 0
    %v149 = vsel %vm100, %v37, 0
    %v152 = vsel %vm100, %v38, 0
    %v155 = vsel %vm100, %v39, 0
    %v158 = vsel %vm100, %v40, 0
    %v161 = vsel %vm100, %v41, 0
    %v164 = vsel %vm100, %v42, 0
    %v167 = vsel %vm100, %v43, 0
    %v170 = vsel %vm100, %v44, 0
    %v173 = vsel %vm100, %v45, 0
    %v176 = vsel %vm100, %v46, 0
    %v179 = vsel %vm100, %v47, 0
    %v182 = vsel %vm100, %v48, 0
    %v185 = vsel %vm100, %v49, 0
    %v188 = vsel %vm100, %v50, 0
    %v191 = vsel %vm100, %v51, 0
    %v194 = vsel %vm100, %v52, 0
    %v197 = vsel %vm100, %v53, 0
    %v200 = vsel %vm100, %v54, 0
    %v203 = vsel %vm100, %v55, 0
    %205 = vmatprep.subr.mxu0 0.0
    %206 = vmatpush1.xpose.msra.mxu0 %v155
    %207 = vmatprep.subr.mxu0 0.0
    %208 = vmatpush1.xpose.msra.mxu0 %v152
    %209 = vmatprep.subr.mxu0 0.0
    %210 = vmatpush1.xpose.msra.mxu0 %v149
    %211 = vmatprep.subr.mxu0 0.0
    %212 = vmatpush1.xpose.msra.mxu0 %v146
    %213 = vmatprep.subr.mxu0 0.0
    %214 = vmatpush1.xpose.msra.mxu0 %v143
    %215 = vmatprep.subr.mxu0 0.0
    %216 = vmatpush1.xpose.msra.mxu0 %v140
    %217 = vmatprep.subr.mxu0 0.0
    %218 = vmatpush1.xpose.msra.mxu0 %v137
    %219 = vmatprep.subr.mxu0 0.0
    %220 = vmatpush1.xpose.msra.mxu0 %v134
    %221 = vmatprep.subr.mxu0 0.0
    %222 = vmatpush1.xpose.msra.mxu0 %v131
    %223 = vmatprep.subr.mxu0 0.0
    %224 = vmatpush1.xpose.msra.mxu0 %v128
    %225 = vmatprep.subr.mxu0 0.0
    %226 = vmatpush1.xpose.msra.mxu0 %v125
    %227 = vmatprep.subr.mxu0 0.0
    %228 = vmatpush1.xpose.msra.mxu0 %v122
    %229 = vmatprep.subr.mxu0 0.0
    %230 = vmatpush1.xpose.msra.mxu0 %v119
    %231 = vmatprep.subr.mxu0 0.0
    %232 = vmatpush1.xpose.msra.mxu0 %v116
    %233 = vmatprep.subr.mxu0 0.0
    %234 = vmatpush1.xpose.msra.mxu0 %v113
    %235 = vmatprep.subr.mxu0 0.0
    %236 = vmatpush1.xpose.msra.mxu0 %v110
    %237 = vmatprep.subr.mxu0 0.0
    %238 = vmatpush2.xpose.msra.mxu0 %v203
    %239 = vmatprep.subr.mxu0 0.0
    %240 = vmatpush2.xpose.msra.mxu0 %v200
    %241 = vmatprep.subr.mxu0 0.0
    %242 = vmatpush2.xpose.msra.mxu0 %v197
    %243 = vmatprep.subr.mxu0 0.0
    %244 = vmatpush2.xpose.msra.mxu0 %v194
    %245 = vmatprep.subr.mxu0 0.0
    %246 = vmatpush2.xpose.msra.mxu0 %v191
    %247 = vmatprep.subr.mxu0 0.0
    %248 = vmatpush2.xpose.msra.mxu0 %v188
    %249 = vmatprep.subr.mxu0 0.0
    %250 = vmatpush2.xpose.msra.mxu0 %v185
    %251 = vmatprep.subr.mxu0 0.0
    %252 = vmatpush2.xpose.msra.mxu0 %v182
    %253 = vmatprep.subr.mxu0 0.0
    %254 = vmatpush2.xpose.msra.mxu0 %v179
    %255 = vmatprep.subr.mxu0 0.0
    %256 = vmatpush2.xpose.msra.mxu0 %v176
    %257 = vmatprep.subr.mxu0 0.0
    %258 = vmatpush2.xpose.msra.mxu0 %v173
    %259 = vmatprep.subr.mxu0 0.0
    %260 = vmatpush2.xpose.msra.mxu0 %v170
    %261 = vmatprep.subr.mxu0 0.0
    %262 = vmatpush2.xpose.msra.mxu0 %v167
    %263 = vmatprep.subr.mxu0 0.0
    %264 = vmatpush2.xpose.msra.mxu0 %v164
    %265 = vmatprep.subr.mxu0 0.0
    %266 = vmatpush2.xpose.msra.mxu0 %v161
    %267 = vmatprep.subr.mxu0 0.0
    %268 = vmatpush2.xpose.msra.mxu0 %v158
    %269 = vmatprep.mubr.f32.mxu0 0.0
    %270 = vmatmul.mubr.f32.gmra.mxu0 %v101
    %v271 = vpop.f32.mrf.mxu0
    %v272 = vadd.f32 %v92, %v271
    %v273 = vpop.f32.mrf.mxu0
    %v274 = vadd.f32 %v93, %v273
    %275 = vmatprep.mubr.f32.mxu0 0.0
    %276 = vmatmul.mubr.f32.gmra.mxu0 %v103
    %v277 = vpop.f32.mrf.mxu0
    %v278 = vadd.f32 %v94, %v277
    %v279 = vpop.f32.mrf.mxu0
    %v280 = vadd.f32 %v95, %v279
    %281 = vmatprep.mubr.f32.mxu0 0.0
    %282 = vmatmul.mubr.f32.gmra.mxu0 %v105
    %v283 = vpop.f32.mrf.mxu0
    %v284 = vadd.f32 %v96, %v283
    %v285 = vpop.f32.mrf.mxu0
    %v286 = vadd.f32 %v97, %v285
    %287 = vmatprep.mubr.f32.mxu0 0.0
    %288 = vmatmul.mubr.f32.gmra.mxu0 %v107
    %v289 = vpop.f32.mrf.mxu0
    %v290 = vadd.f32 %v98, %v289
    %v291 = vpop.f32.mrf.mxu0
    %v292 = vadd.f32 %v99, %v291
    %293 = vdwg.mxu0
    %v294 = vld [vmem:[%s5] sm:$0xff]
    %v295 = vld [vmem:[%s5 + $0x8] sm:$0xff]
    %v296 = vld [vmem:[%s5 + $0x10] sm:$0xff]
    %v297 = vld [vmem:[%s5 + $0x18] sm:$0xff]
    %v298 = vld [vmem:[%s5 + $0x20] sm:$0xff]
    %v299 = vld [vmem:[%s5 + $0x28] sm:$0xff]
    %v300 = vld [vmem:[%s5 + $0x30] sm:$0xff]
    %v301 = vld [vmem:[%s5 + $0x38] sm:$0xff]
    %v302 = vadd.f32 %v272, %v274
    %303 = vadd.xlane.f32.xlu0 %v302
    %v304 = vpop.xlane.xlu0 %303
    %v305 = vadd.f32 %v278, %v280
    %306 = vadd.xlane.f32.xlu0 %v305
    %v307 = vpop.xlane.xlu0 %306
    %v308 = vadd.f32 %v284, %v286
    %309 = vadd.xlane.f32.xlu0 %v308
    %v310 = vpop.xlane.xlu0 %309
    %v311 = vadd.f32 %v290, %v292
    %312 = vadd.xlane.f32.xlu0 %v311
    %v313 = vpop.xlane.xlu0 %312
    %v314 = vmul.f32 %v304, 0.00390625
    %v315 = vmul.f32 %v307, 0.00390625
    %v316 = vmul.f32 %v310, 0.00390625
    %v317 = vmul.f32 %v313, 0.00390625
    %v318 = vmul.f32 %v272, %v272
    %v319 = vmul.f32 %v274, %v274
    %v320 = vmul.f32 %v278, %v278
    %v321 = vmul.f32 %v280, %v280
    %v322 = vmul.f32 %v284, %v284
    %v323 = vmul.f32 %v286, %v286
    %v324 = vmul.f32 %v290, %v290
    %v325 = vmul.f32 %v292, %v292
    %v326 = vadd.f32 %v318, %v319
    %327 = vadd.xlane.f32.xlu0 %v326
    %v328 = vpop.xlane.xlu0 %327
    %v329 = vadd.f32 %v320, %v321
    %330 = vadd.xlane.f32.xlu0 %v329
    %v331 = vpop.xlane.xlu0 %330
    %v332 = vadd.f32 %v322, %v323
    %333 = vadd.xlane.f32.xlu0 %v332
    %v334 = vpop.xlane.xlu0 %333
    %v335 = vadd.f32 %v324, %v325
    %336 = vadd.xlane.f32.xlu0 %v335
    %v337 = vpop.xlane.xlu0 %336
    %v338 = vmul.f32 %v328, 0.00390625
    %v339 = vmul.f32 %v331, 0.00390625
    %v340 = vmul.f32 %v334, 0.00390625
    %v341 = vmul.f32 %v337, 0.00390625
    %v342 = vmul.f32 %v314, %v314
    %v343 = vmul.f32 %v315, %v315
    %v344 = vmul.f32 %v316, %v316
    %v345 = vmul.f32 %v317, %v317
    %v346 = vsub.f32 %v338, %v342
    %v347 = vsub.f32 %v339, %v343
    %v348 = vsub.f32 %v340, %v344
    %v349 = vsub.f32 %v341, %v345
    %v350 = vadd.f32 %v346, 1e-05
    %v351 = vadd.f32 %v347, 1e-05
    %v352 = vadd.f32 %v348, 1e-05
    %v353 = vadd.f32 %v349, 1e-05
    %v354 = vrsqrt.pop %v350
    %v355 = vrsqrt.pop %v351
    %v356 = vrsqrt.pop %v352
    %v357 = vrsqrt.pop %v353
    %v358 = vmul.f32 %v294, %v354
    %v359 = vmul.f32 %v295, %v355
    %v360 = vmul.f32 %v296, %v356
    %v361 = vmul.f32 %v297, %v357
    %v362 = vmul.f32 %v314, %v358
    %v363 = vmul.f32 %v315, %v359
    %v364 = vmul.f32 %v316, %v360
    %v365 = vmul.f32 %v317, %v361
    %v366 = vsub.f32 %v298, %v362
    %v367 = vsub.f32 %v299, %v363
    %v368 = vsub.f32 %v300, %v364
    %v369 = vsub.f32 %v301, %v365
    %371 = vset.pattern.permute.xlu0 0
    %372 = vperm.xlu0 %371, %v358
    %v373 = vpop.permute.xlu0 %372
    %376 = vset.pattern.permute.xlu0 0
    %377 = vperm.xlu0 %376, %v359
    %v378 = vpop.permute.xlu0 %377
    %381 = vset.pattern.permute.xlu0 0
    %382 = vperm.xlu0 %381, %v360
    %v383 = vpop.permute.xlu0 %382
    %386 = vset.pattern.permute.xlu0 0
    %387 = vperm.xlu0 %386, %v361
    %v388 = vpop.permute.xlu0 %387
    %v390 = vmul.f32 %v272, %v373
    %v391 = vmul.f32 %v274, %v373
    %v392 = vmul.f32 %v278, %v378
    %v393 = vmul.f32 %v280, %v378
    %v394 = vmul.f32 %v284, %v383
    %v395 = vmul.f32 %v286, %v383
    %v396 = vmul.f32 %v290, %v388
    %v397 = vmul.f32 %v292, %v388
    %399 = vset.pattern.permute.xlu0 0
    %400 = vperm.xlu0 %399, %v366
    %v401 = vpop.permute.xlu0 %400
    %404 = vset.pattern.permute.xlu0 0
    %405 = vperm.xlu0 %404, %v367
    %v406 = vpop.permute.xlu0 %405
    %409 = vset.pattern.permute.xlu0 0
    %410 = vperm.xlu0 %409, %v368
    %v411 = vpop.permute.xlu0 %410
    %414 = vset.pattern.permute.xlu0 0
    %415 = vperm.xlu0 %414, %v369
    %v416 = vpop.permute.xlu0 %415
    %v418 = vadd.f32 %v390, %v401
    %v419 = vadd.f32 %v391, %v401
    %v420 = vadd.f32 %v392, %v406
    %v421 = vadd.f32 %v393, %v406
    %v422 = vadd.f32 %v394, %v411
    %v423 = vadd.f32 %v395, %v411
    %v424 = vadd.f32 %v396, %v416
    %v425 = vadd.f32 %v397, %v416
    %v426 = vmax.f32 %v418, 0.0
    %v427 = vmax.f32 %v419, 0.0
    %v428 = vmax.f32 %v420, 0.0
    %v429 = vmax.f32 %v421, 0.0
    %v430 = vmax.f32 %v422, 0.0
    %v431 = vmax.f32 %v423, 0.0
    %v432 = vmax.f32 %v424, 0.0
    %v433 = vmax.f32 %v425, 0.0
    %v434 = vld [vmem:[%s3] sm:$0xff]
    %v435 = vld [vmem:[%s3 + $0x8] sm:$0xff]
    %v436 = vld [vmem:[%s3 + $0x10] sm:$0xff]
    %v437 = vld [vmem:[%s3 + $0x18] sm:$0xff]
    %v438 = vld [vmem:[%s3 + $0x20] sm:$0xff]
    %v439 = vld [vmem:[%s3 + $0x28] sm:$0xff]
    %v440 = vld [vmem:[%s3 + $0x30] sm:$0xff]
    %v441 = vld [vmem:[%s3 + $0x38] sm:$0xff]
    %vm442 = vcmask 261120
    %v444 = vsel %vm442, %v434, 0
    %v447 = vsel %vm442, %v435, 0
    %v450 = vsel %vm442, %v436, 0
    %v453 = vsel %vm442, %v437, 0
    %v456 = vsel %vm442, %v438, 0
    %v459 = vsel %vm442, %v439, 0
    %v462 = vsel %vm442, %v440, 0
    %v465 = vsel %vm442, %v441, 0
    %467 = vmatprep.subr.mxu0 0.0
    %468 = vmatpush1.msra.mxu0 0.0
    %469 = vmatprep.subr.mxu0 0.0
    %470 = vmatpush1.msra.mxu0 0.0
    %471 = vmatprep.subr.mxu0 0.0
    %472 = vmatpush1.msra.mxu0 0.0
    %473 = vmatprep.subr.mxu0 0.0
    %474 = vmatpush1.msra.mxu0 0.0
    %475 = vmatprep.subr.mxu0 0.0
    %476 = vmatpush1.msra.mxu0 0.0
    %477 = vmatprep.subr.mxu0 0.0
    %478 = vmatpush1.msra.mxu0 0.0
    %479 = vmatprep.subr.mxu0 0.0
    %480 = vmatpush1.msra.mxu0 0.0
    %481 = vmatprep.subr.mxu0 0.0
    %482 = vmatpush1.msra.mxu0 0.0
    %483 = vmatprep.subr.mxu0 0.0
    %484 = vmatpush1.msra.mxu0 0.0
    %485 = vmatprep.subr.mxu0 0.0
    %486 = vmatpush1.msra.mxu0 0.0
    %487 = vmatprep.subr.mxu0 0.0
    %488 = vmatpush1.msra.mxu0 0.0
    %489 = vmatprep.subr.mxu0 0.0
    %490 = vmatpush1.msra.mxu0 0.0
    %491 = vmatprep.subr.mxu0 %v433
    %492 = vmatpush1.msra.mxu0 %v432
    %493 = vmatprep.subr.mxu0 %v431
    %494 = vmatpush1.msra.mxu0 %v430
    %495 = vmatprep.subr.mxu0 %v429
    %496 = vmatpush1.msra.mxu0 %v428
    %497 = vmatprep.subr.mxu0 %v427
    %498 = vmatpush1.msra.mxu0 %v426
    %499 = vmatprep.subr.mxu0 0.0
    %500 = vmatpush2.msra.mxu0 0.0
    %501 = vmatprep.subr.mxu0 0.0
    %502 = vmatpush2.msra.mxu0 0.0
    %503 = vmatprep.subr.mxu0 0.0
    %504 = vmatpush2.msra.mxu0 0.0
    %505 = vmatprep.subr.mxu0 0.0
    %506 = vmatpush2.msra.mxu0 0.0
    %507 = vmatprep.subr.mxu0 0.0
    %508 = vmatpush2.msra.mxu0 0.0
    %509 = vmatprep.subr.mxu0 0.0
    %510 = vmatpush2.msra.mxu0 0.0
    %511 = vmatprep.subr.mxu0 0.0
    %512 = vmatpush2.msra.mxu0 0.0
    %513 = vmatprep.subr.mxu0 0.0
    %514 = vmatpush2.msra.mxu0 0.0
    %515 = vmatprep.subr.mxu0 0.0
    %516 = vmatpush2.msra.mxu0 0.0
    %517 = vmatprep.subr.mxu0 0.0
    %518 = vmatpush2.msra.mxu0 0.0
    %519 = vmatprep.subr.mxu0 0.0
    %520 = vmatpush2.msra.mxu0 0.0
    %521 = vmatprep.subr.mxu0 0.0
    %522 = vmatpush2.msra.mxu0 0.0
    %523 = vmatprep.subr.mxu0 0.0
    %524 = vmatpush2.msra.mxu0 0.0
    %525 = vmatprep.subr.mxu0 0.0
    %526 = vmatpush2.msra.mxu0 0.0
    %527 = vmatprep.subr.mxu0 0.0
    %528 = vmatpush2.msra.mxu0 0.0
    %529 = vmatprep.subr.mxu0 0.0
    %530 = vmatpush2.msra.mxu0 0.0
    %531 = vmatprep.mubr.f32.mxu0 0.0
    %532 = vmatmul.mubr.f32.gmra.mxu0 %v444
    %v533 = vpop.f32.mrf.mxu0
    %v534 = vadd.f32 0.0, %v533
    %v535 = vpop.f32.mrf.mxu0
    %v536 = vadd.f32 0.0, %v535
    %537 = vmatprep.mubr.f32.mxu0 0.0
    %538 = vmatmul.mubr.f32.gmra.mxu0 %v447
    %v539 = vpop.f32.mrf.mxu0
    %v540 = vadd.f32 0.0, %v539
    %v541 = vpop.f32.mrf.mxu0
    %v542 = vadd.f32 0.0, %v541
    %543 = vmatprep.mubr.f32.mxu0 0.0
    %544 = vmatmul.mubr.f32.gmra.mxu0 %v450
    %v545 = vpop.f32.mrf.mxu0
    %v546 = vadd.f32 0.0, %v545
    %v547 = vpop.f32.mrf.mxu0
    %v548 = vadd.f32 0.0, %v547
    %549 = vmatprep.mubr.f32.mxu0 0.0
    %550 = vmatmul.mubr.f32.gmra.mxu0 %v453
    %v551 = vpop.f32.mrf.mxu0
    %v552 = vadd.f32 0.0, %v551
    %v553 = vpop.f32.mrf.mxu0
    %v554 = vadd.f32 0.0, %v553
    %555 = vmatprep.mubr.f32.mxu0 0.0
    %556 = vmatmul.mubr.f32.gmra.mxu0 %v456
    %v557 = vpop.f32.mrf.mxu0
    %v558 = vadd.f32 0.0, %v557
    %v559 = vpop.f32.mrf.mxu0
    %v560 = vadd.f32 0.0, %v559
    %561 = vmatprep.mubr.f32.mxu0 0.0
    %562 = vmatmul.mubr.f32.gmra.mxu0 %v459
    %v563 = vpop.f32.mrf.mxu0
    %v564 = vadd.f32 0.0, %v563
    %v565 = vpop.f32.mrf.mxu0
    %v566 = vadd.f32 0.0, %v565
    %567 = vmatprep.mubr.f32.mxu0 0.0
    %568 = vmatmul.mubr.f32.gmra.mxu0 %v462
    %v569 = vpop.f32.mrf.mxu0
    %v570 = vadd.f32 0.0, %v569
    %v571 = vpop.f32.mrf.mxu0
    %v572 = vadd.f32 0.0, %v571
    %573 = vmatprep.mubr.f32.mxu0 0.0
    %574 = vmatmul.mubr.f32.gmra.mxu0 %v465
    %v575 = vpop.f32.mrf.mxu0
    %v576 = vadd.f32 0.0, %v575
    %v577 = vpop.f32.mrf.mxu0
    %v578 = vadd.f32 0.0, %v577
    %579 = vdwg.mxu0
    %v580 = vld [vmem:[%s5 + $0x40] sm:$0xff]
    %v581 = vld [vmem:[%s5 + $0x48] sm:$0xff]
    %v582 = vld [vmem:[%s5 + $0x50] sm:$0xff]
    %v583 = vld [vmem:[%s5 + $0x58] sm:$0xff]
    %v584 = vld [vmem:[%s5 + $0x60] sm:$0xff]
    %v585 = vld [vmem:[%s5 + $0x68] sm:$0xff]
    %v586 = vld [vmem:[%s5 + $0x70] sm:$0xff]
    %v587 = vld [vmem:[%s5 + $0x78] sm:$0xff]
    %v588 = vld [vmem:[%s5 + $0x80] sm:$0xff]
    %v589 = vld [vmem:[%s5 + $0x88] sm:$0xff]
    %v590 = vld [vmem:[%s5 + $0x90] sm:$0xff]
    %v591 = vld [vmem:[%s5 + $0x98] sm:$0xff]
    %v592 = vld [vmem:[%s5 + $0xa0] sm:$0xff]
    %v593 = vld [vmem:[%s5 + $0xa8] sm:$0xff]
    %v594 = vld [vmem:[%s5 + $0xb0] sm:$0xff]
    %v595 = vld [vmem:[%s5 + $0xb8] sm:$0xff]
    %v596 = vadd.f32 %v534, %v536
    %597 = vadd.xlane.f32.xlu0 %v596
    %v598 = vpop.xlane.xlu0 %597
    %v599 = vadd.f32 %v540, %v542
    %600 = vadd.xlane.f32.xlu0 %v599
    %v601 = vpop.xlane.xlu0 %600
    %v602 = vadd.f32 %v546, %v548
    %603 = vadd.xlane.f32.xlu0 %v602
    %v604 = vpop.xlane.xlu0 %603
    %v605 = vadd.f32 %v552, %v554
    %606 = vadd.xlane.f32.xlu0 %v605
    %v607 = vpop.xlane.xlu0 %606
    %v608 = vadd.f32 %v558, %v560
    %609 = vadd.xlane.f32.xlu0 %v608
    %v610 = vpop.xlane.xlu0 %609
    %v611 = vadd.f32 %v564, %v566
    %612 = vadd.xlane.f32.xlu0 %v611
    %v613 = vpop.xlane.xlu0 %612
    %v614 = vadd.f32 %v570, %v572
    %615 = vadd.xlane.f32.xlu0 %v614
    %v616 = vpop.xlane.xlu0 %615
    %v617 = vadd.f32 %v576, %v578
    %618 = vadd.xlane.f32.xlu0 %v617
    %v619 = vpop.xlane.xlu0 %618
    %v620 = vmul.f32 %v598, 0.00390625
    %v621 = vmul.f32 %v601, 0.00390625
    %v622 = vmul.f32 %v604, 0.00390625
    %v623 = vmul.f32 %v607, 0.00390625
    %v624 = vmul.f32 %v610, 0.00390625
    %v625 = vmul.f32 %v613, 0.00390625
    %v626 = vmul.f32 %v616, 0.00390625
    %v627 = vmul.f32 %v619, 0.00390625
    %v628 = vmul.f32 %v534, %v534
    %v629 = vmul.f32 %v536, %v536
    %v630 = vmul.f32 %v540, %v540
    %v631 = vmul.f32 %v542, %v542
    %v632 = vmul.f32 %v546, %v546
    %v633 = vmul.f32 %v548, %v548
    %v634 = vmul.f32 %v552, %v552
    %v635 = vmul.f32 %v554, %v554
    %v636 = vmul.f32 %v558, %v558
    %v637 = vmul.f32 %v560, %v560
    %v638 = vmul.f32 %v564, %v564
    %v639 = vmul.f32 %v566, %v566
    %v640 = vmul.f32 %v570, %v570
    %v641 = vmul.f32 %v572, %v572
    %v642 = vmul.f32 %v576, %v576
    %v643 = vmul.f32 %v578, %v578
    %v644 = vadd.f32 %v628, %v629
    %645 = vadd.xlane.f32.xlu0 %v644
    %v646 = vpop.xlane.xlu0 %645
    %v647 = vadd.f32 %v630, %v631
    %648 = vadd.xlane.f32.xlu0 %v647
    %v649 = vpop.xlane.xlu0 %648
    %v650 = vadd.f32 %v632, %v633
    %651 = vadd.xlane.f32.xlu0 %v650
    %v652 = vpop.xlane.xlu0 %651
    %v653 = vadd.f32 %v634, %v635
    %654 = vadd.xlane.f32.xlu0 %v653
    %v655 = vpop.xlane.xlu0 %654
    %v656 = vadd.f32 %v636, %v637
    %657 = vadd.xlane.f32.xlu0 %v656
    %v658 = vpop.xlane.xlu0 %657
    %v659 = vadd.f32 %v638, %v639
    %660 = vadd.xlane.f32.xlu0 %v659
    %v661 = vpop.xlane.xlu0 %660
    %v662 = vadd.f32 %v640, %v641
    %663 = vadd.xlane.f32.xlu0 %v662
    %v664 = vpop.xlane.xlu0 %663
    %v665 = vadd.f32 %v642, %v643
    %666 = vadd.xlane.f32.xlu0 %v665
    %v667 = vpop.xlane.xlu0 %666
    %v668 = vmul.f32 %v646, 0.00390625
    %v669 = vmul.f32 %v649, 0.00390625
    %v670 = vmul.f32 %v652, 0.00390625
    %v671 = vmul.f32 %v655, 0.00390625
    %v672 = vmul.f32 %v658, 0.00390625
    %v673 = vmul.f32 %v661, 0.00390625
    %v674 = vmul.f32 %v664, 0.00390625
    %v675 = vmul.f32 %v667, 0.00390625
    %v676 = vmul.f32 %v620, %v620
    %v677 = vmul.f32 %v621, %v621
    %v678 = vmul.f32 %v622, %v622
    %v679 = vmul.f32 %v623, %v623
    %v680 = vmul.f32 %v624, %v624
    %v681 = vmul.f32 %v625, %v625
    %v682 = vmul.f32 %v626, %v626
    %v683 = vmul.f32 %v627, %v627
    %v684 = vsub.f32 %v668, %v676
    %v685 = vsub.f32 %v669, %v677
    %v686 = vsub.f32 %v670, %v678
    %v687 = vsub.f32 %v671, %v679
    %v688 = vsub.f32 %v672, %v680
    %v689 = vsub.f32 %v673, %v681
    %v690 = vsub.f32 %v674, %v682
    %v691 = vsub.f32 %v675, %v683
    %v692 = vadd.f32 %v684, 1e-05
    %v693 = vadd.f32 %v685, 1e-05
    %v694 = vadd.f32 %v686, 1e-05
    %v695 = vadd.f32 %v687, 1e-05
    %v696 = vadd.f32 %v688, 1e-05
    %v697 = vadd.f32 %v689, 1e-05
    %v698 = vadd.f32 %v690, 1e-05
    %v699 = vadd.f32 %v691, 1e-05
    %v700 = vrsqrt.pop %v692
    %v701 = vrsqrt.pop %v693
    %v702 = vrsqrt.pop %v694
    %v703 = vrsqrt.pop %v695
    %v704 = vrsqrt.pop %v696
    %v705 = vrsqrt.pop %v697
    %v706 = vrsqrt.pop %v698
    %v707 = vrsqrt.pop %v699
    %v708 = vmul.f32 %v580, %v700
    %v709 = vmul.f32 %v581, %v701
    %v710 = vmul.f32 %v582, %v702
    %v711 = vmul.f32 %v583, %v703
    %v712 = vmul.f32 %v584, %v704
    %v713 = vmul.f32 %v585, %v705
    %v714 = vmul.f32 %v586, %v706
    %v715 = vmul.f32 %v587, %v707
    %v716 = vmul.f32 %v620, %v708
    %v717 = vmul.f32 %v621, %v709
    %v718 = vmul.f32 %v622, %v710
    %v719 = vmul.f32 %v623, %v711
    %v720 = vmul.f32 %v624, %v712
    %v721 = vmul.f32 %v625, %v713
    %v722 = vmul.f32 %v626, %v714
    %v723 = vmul.f32 %v627, %v715
    %v724 = vsub.f32 %v588, %v716
    %v725 = vsub.f32 %v589, %v717
    %v726 = vsub.f32 %v590, %v718
    %v727 = vsub.f32 %v591, %v719
    %v728 = vsub.f32 %v592, %v720
    %v729 = vsub.f32 %v593, %v721
    %v730 = vsub.f32 %v594, %v722
    %v731 = vsub.f32 %v595, %v723
    %733 = vset.pattern.permute.xlu0 0
    %734 = vperm.xlu0 %733, %v708
    %v735 = vpop.permute.xlu0 %734
    %738 = vset.pattern.permute.xlu0 0
    %739 = vperm.xlu0 %738, %v709
    %v740 = vpop.permute.xlu0 %739
    %743 = vset.pattern.permute.xlu0 0
    %744 = vperm.xlu0 %743, %v710
    %v745 = vpop.permute.xlu0 %744
    %748 = vset.pattern.permute.xlu0 0
    %749 = vperm.xlu0 %748, %v711
    %v750 = vpop.permute.xlu0 %749
    %753 = vset.pattern.permute.xlu0 0
    %754 = vperm.xlu0 %753, %v712
    %v755 = vpop.permute.xlu0 %754
    %758 = vset.pattern.permute.xlu0 0
    %759 = vperm.xlu0 %758, %v713
    %v760 = vpop.permute.xlu0 %759
    %763 = vset.pattern.permute.xlu0 0
    %764 = vperm.xlu0 %763, %v714
    %v765 = vpop.permute.xlu0 %764
    %768 = vset.pattern.permute.xlu0 0
    %769 = vperm.xlu0 %768, %v715
    %v770 = vpop.permute.xlu0 %769
    %v772 = vmul.f32 %v534, %v735
    %v773 = vmul.f32 %v536, %v735
    %v774 = vmul.f32 %v540, %v740
    %v775 = vmul.f32 %v542, %v740
    %v776 = vmul.f32 %v546, %v745
    %v777 = vmul.f32 %v548, %v745
    %v778 = vmul.f32 %v552, %v750
    %v779 = vmul.f32 %v554, %v750
    %v780 = vmul.f32 %v558, %v755
    %v781 = vmul.f32 %v560, %v755
    %v782 = vmul.f32 %v564, %v760
    %v783 = vmul.f32 %v566, %v760
    %v784 = vmul.f32 %v570, %v765
    %v785 = vmul.f32 %v572, %v765
    %v786 = vmul.f32 %v576, %v770
    %v787 = vmul.f32 %v578, %v770
    %789 = vset.pattern.permute.xlu0 0
    %790 = vperm.xlu0 %789, %v724
    %v791 = vpop.permute.xlu0 %790
    %794 = vset.pattern.permute.xlu0 0
    %795 = vperm.xlu0 %794, %v725
    %v796 = vpop.permute.xlu0 %795
    %799 = vset.pattern.permute.xlu0 0
    %800 = vperm.xlu0 %799, %v726
    %v801 = vpop.permute.xlu0 %800
    %804 = vset.pattern.permute.xlu0 0
    %805 = vperm.xlu0 %804, %v727
    %v806 = vpop.permute.xlu0 %805
    %809 = vset.pattern.permute.xlu0 0
    %810 = vperm.xlu0 %809, %v728
    %v811 = vpop.permute.xlu0 %810
    %814 = vset.pattern.permute.xlu0 0
    %815 = vperm.xlu0 %814, %v729
    %v816 = vpop.permute.xlu0 %815
    %819 = vset.pattern.permute.xlu0 0
    %820 = vperm.xlu0 %819, %v730
    %v821 = vpop.permute.xlu0 %820
    %824 = vset.pattern.permute.xlu0 0
    %825 = vperm.xlu0 %824, %v731
    %v826 = vpop.permute.xlu0 %825
    %v828 = vadd.f32 %v772, %v791
    %v829 = vadd.f32 %v773, %v791
    %v830 = vadd.f32 %v774, %v796
    %v831 = vadd.f32 %v775, %v796
    %v832 = vadd.f32 %v776, %v801
    %v833 = vadd.f32 %v777, %v801
    %v834 = vadd.f32 %v778, %v806
    %v835 = vadd.f32 %v779, %v806
    %v836 = vadd.f32 %v780, %v811
    %v837 = vadd.f32 %v781, %v811
    %v838 = vadd.f32 %v782, %v816
    %v839 = vadd.f32 %v783, %v816
    %v840 = vadd.f32 %v784, %v821
    %v841 = vadd.f32 %v785, %v821
    %v842 = vadd.f32 %v786, %v826
    %v843 = vadd.f32 %v787, %v826
    %v844 = vmax.f32 %v828, 0.0
    %v845 = vmax.f32 %v829, 0.0
    %v846 = vmax.f32 %v830, 0.0
    %v847 = vmax.f32 %v831, 0.0
    %v848 = vmax.f32 %v832, 0.0
    %v849 = vmax.f32 %v833, 0.0
    %v850 = vmax.f32 %v834, 0.0
    %v851 = vmax.f32 %v835, 0.0
    %v852 = vmax.f32 %v836, 0.0
    %v853 = vmax.f32 %v837, 0.0
    %v854 = vmax.f32 %v838, 0.0
    %v855 = vmax.f32 %v839, 0.0
    %v856 = vmax.f32 %v840, 0.0
    %v857 = vmax.f32 %v841, 0.0
    %v858 = vmax.f32 %v842, 0.0
    %v859 = vmax.f32 %v843, 0.0
    %v860 = vld [vmem:[%s5 + $0xc0] sm:$0xff]
    %v861 = vld [vmem:[%s5 + $0xc8] sm:$0xff]
    %v862 = vld [vmem:[%s5 + $0xd0] sm:$0xff]
    %v863 = vld [vmem:[%s5 + $0xd8] sm:$0xff]
    %v864 = vld [vmem:[%s4] sm:$0xff]
    %v865 = vld [vmem:[%s4 + $0x8] sm:$0xff]
    %v866 = vld [vmem:[%s4 + $0x10] sm:$0xff]
    %v867 = vld [vmem:[%s4 + $0x18] sm:$0xff]
    %869 = vset.pattern.permute.xlu0 0
    %870 = vperm.xlu0 %869, %v860
    %v871 = vpop.permute.xlu0 %870
    %874 = vset.pattern.permute.xlu0 0
    %875 = vperm.xlu0 %874, %v861
    %v876 = vpop.permute.xlu0 %875
    %879 = vset.pattern.permute.xlu0 0
    %880 = vperm.xlu0 %879, %v862
    %v881 = vpop.permute.xlu0 %880
    %884 = vset.pattern.permute.xlu0 0
    %885 = vperm.xlu0 %884, %v863
    %v886 = vpop.permute.xlu0 %885
    %vm888 = vcmask 523264
    %v890 = vsel %vm888, %v864, 0
    %v893 = vsel %vm888, %v865, 0
    %v896 = vsel %vm888, %v866, 0
    %v899 = vsel %vm888, %v867, 0
    %901 = vmatprep.subr.mxu0 0.0
    %902 = vmatpush1.msra.mxu0 0.0
    %903 = vmatprep.subr.mxu0 0.0
    %904 = vmatpush1.msra.mxu0 0.0
    %905 = vmatprep.subr.mxu0 0.0
    %906 = vmatpush1.msra.mxu0 0.0
    %907 = vmatprep.subr.mxu0 0.0
    %908 = vmatpush1.msra.mxu0 0.0
    %909 = vmatprep.subr.mxu0 0.0
    %910 = vmatpush1.msra.mxu0 0.0
    %911 = vmatprep.subr.mxu0 0.0
    %912 = vmatpush1.msra.mxu0 0.0
    %913 = vmatprep.subr.mxu0 0.0
    %914 = vmatpush1.msra.mxu0 0.0
    %915 = vmatprep.subr.mxu0 0.0
    %916 = vmatpush1.msra.mxu0 0.0
    %917 = vmatprep.subr.mxu0 %v859
    %918 = vmatpush1.msra.mxu0 %v858
    %919 = vmatprep.subr.mxu0 %v857
    %920 = vmatpush1.msra.mxu0 %v856
    %921 = vmatprep.subr.mxu0 %v855
    %922 = vmatpush1.msra.mxu0 %v854
    %923 = vmatprep.subr.mxu0 %v853
    %924 = vmatpush1.msra.mxu0 %v852
    %925 = vmatprep.subr.mxu0 %v851
    %926 = vmatpush1.msra.mxu0 %v850
    %927 = vmatprep.subr.mxu0 %v849
    %928 = vmatpush1.msra.mxu0 %v848
    %929 = vmatprep.subr.mxu0 %v847
    %930 = vmatpush1.msra.mxu0 %v846
    %931 = vmatprep.subr.mxu0 %v845
    %932 = vmatpush1.msra.mxu0 %v844
    %933 = vmatprep.subr.mxu0 0.0
    %934 = vmatpush2.msra.mxu0 0.0
    %935 = vmatprep.subr.mxu0 0.0
    %936 = vmatpush2.msra.mxu0 0.0
    %937 = vmatprep.subr.mxu0 0.0
    %938 = vmatpush2.msra.mxu0 0.0
    %939 = vmatprep.subr.mxu0 0.0
    %940 = vmatpush2.msra.mxu0 0.0
    %941 = vmatprep.subr.mxu0 0.0
    %942 = vmatpush2.msra.mxu0 0.0
    %943 = vmatprep.subr.mxu0 0.0
    %944 = vmatpush2.msra.mxu0 0.0
    %945 = vmatprep.subr.mxu0 0.0
    %946 = vmatpush2.msra.mxu0 0.0
    %947 = vmatprep.subr.mxu0 0.0
    %948 = vmatpush2.msra.mxu0 0.0
    %949 = vmatprep.subr.mxu0 0.0
    %950 = vmatpush2.msra.mxu0 0.0
    %951 = vmatprep.subr.mxu0 0.0
    %952 = vmatpush2.msra.mxu0 0.0
    %953 = vmatprep.subr.mxu0 0.0
    %954 = vmatpush2.msra.mxu0 0.0
    %955 = vmatprep.subr.mxu0 0.0
    %956 = vmatpush2.msra.mxu0 0.0
    %957 = vmatprep.subr.mxu0 0.0
    %958 = vmatpush2.msra.mxu0 0.0
    %959 = vmatprep.subr.mxu0 0.0
    %960 = vmatpush2.msra.mxu0 0.0
    %961 = vmatprep.subr.mxu0 0.0
    %962 = vmatpush2.msra.mxu0 0.0
    %963 = vmatprep.subr.mxu0 0.0
    %964 = vmatpush2.msra.mxu0 0.0
    %965 = vmatprep.mubr.f32.mxu0 0.0
    %966 = vmatmul.mubr.f32.gmra.mxu0 %v890
    %v967 = vpop.f32.mrf.mxu0
    %v968 = vadd.f32 %v871, %v967
    %v969 = vpop.f32.mrf.mxu0
    %v970 = vadd.f32 %v871, %v969
    %971 = vmatprep.mubr.f32.mxu0 0.0
    %972 = vmatmul.mubr.f32.gmra.mxu0 %v893
    %v973 = vpop.f32.mrf.mxu0
    %v974 = vadd.f32 %v876, %v973
    %v975 = vpop.f32.mrf.mxu0
    %v976 = vadd.f32 %v876, %v975
    %977 = vmatprep.mubr.f32.mxu0 0.0
    %978 = vmatmul.mubr.f32.gmra.mxu0 %v896
    %v979 = vpop.f32.mrf.mxu0
    %v980 = vadd.f32 %v881, %v979
    %v981 = vpop.f32.mrf.mxu0
    %v982 = vadd.f32 %v881, %v981
    %983 = vmatprep.mubr.f32.mxu0 0.0
    %984 = vmatmul.mubr.f32.gmra.mxu0 %v899
    %v985 = vpop.f32.mrf.mxu0
    %v986 = vadd.f32 %v886, %v985
    %v987 = vpop.f32.mrf.mxu0
    %v988 = vadd.f32 %v886, %v987
    %989 = vdwg.mxu0
    %990 = vst [vmem:[#allocation2] sm:$0xff] %v968
    %991 = vst [vmem:[#allocation2 + $0x8] sm:$0xff] %v970
    %992 = vst [vmem:[#allocation2 + $0x10] sm:$0xff] %v974
    %993 = vst [vmem:[#allocation2 + $0x18] sm:$0xff] %v976
    %994 = vst [vmem:[#allocation2 + $0x20] sm:$0xff] %v980
    %995 = vst [vmem:[#allocation2 + $0x28] sm:$0xff] %v982
    %996 = vst [vmem:[#allocation2 + $0x30] sm:$0xff] %v986
    %997 = vst [vmem:[#allocation2 + $0x38] sm:$0xff] %v988
    // Predicated region
    $region26: #{tpu_custom_call.1} parent=1 // pred_check
      _
    $region27: #{tpu_custom_call.1} parent=1 // pred_check_branch
      %999 = sbr.rel (0) target = $region29
    $region28: #{tpu_custom_call.1} parent=1 // pred_region
      %s1001 = ssub.s32 1024, 1024
      %1002 = vsyncadd [#allocation3], %s1001
      %s1003 = sshll.u32 [#allocation2], 4
      %s1004 = int_to_ptr.vmem [resolvable:$true] %s1003
      %1009 = dma.vmem_to_hbm [thread:$0]  %s1004, 1024, %s6, [#allocation3], 256, 256, 16
    $region29: #{tpu_custom_call.1} parent=1 // pred_fallthru
      _
    // Predicated region
    $region30: #{tpu_custom_call.1} parent=1 // pred_check
      _
    $region31: #{tpu_custom_call.1} parent=1 // pred_check_branch
      %1011 = sbr.rel (0) target = $region33
    $region32: #{tpu_custom_call.1} parent=1 // pred_region
      %1012 = dma.done [#allocation3], 1024
    $region33: #{tpu_custom_call.1} parent=1 // pred_fallthru
      _
    %1013 = vsyncpa [#allocation3], 1

</llo_original>
